<compile_context>
chip_gen: v6e
topology: v6e:2x2x1
jax: 0.10.0
libtpu: 0.0.40
codegen_flags: <defaults>
</compile_context>

<pallas_src>
import jax
import jax.numpy as jnp
from jax import lax
from jax.experimental import pallas as pl
from jax.experimental.pallas import tpu as pltpu


def lstm_tagger_kernel(x_ref, w_slab_ref, tag_slab_ref, out_ref, h_scratch):
    """Full LSTM recurrence + hidden2tag + log_softmax in one invocation.

    x_ref        : (S, E)       f32  embedded sentence
    w_slab_ref   : (E+H+1, 4H)  f32  [W_ih^T ; W_hh^T ; b_ih+b_hh]  (gate order i,f,g,o)
    tag_slab_ref : (H+1, T)     f32  [W_tag^T ; b_tag]
    out_ref      : (S, T)       f32  log-softmax tag scores
    h_scratch    : (S, H)       f32  VMEM scratch holding every h_t
    """
    S, E = x_ref.shape
    H4 = w_slab_ref.shape[1]
    H = H4 // 4

    # Unpack the weight slab (all slice starts are 8-row aligned: E=H=32).
    wih_t = w_slab_ref[0:E, :]                 # (E, 4H)
    whh_t = w_slab_ref[E:E + H, :]             # (H, 4H)  -- resident in 4 vregs
    bias = w_slab_ref[E + H:E + H + 1, :]      # (1, 4H)

    # Hoisted input projection: one (S,E)@(E,4H) MXU pass, kept as a value
    # (exactly one vreg at S=8, 4H=128) — no scratch round trip.
    gx = (
        jnp.dot(x_ref[...], wih_t, preferred_element_type=jnp.float32)
        + bias
    )                                          # (S, 4H)

    # Constant scale/offset vectors for the sigmoid-via-tanh trick (hoisted).
    lane = lax.broadcasted_iota(jnp.int32, (1, H4), 1)
    is_g = (lane >= 2 * H) & (lane < 3 * H)
    scale = jnp.where(is_g, 1.0, 0.5).astype(jnp.float32)   # 0.5 on i/f/o, 1.0 on g
    offset = 1.0 - scale                                     # 0.5 on i/f/o, 0.0 on g

    h = jnp.zeros((1, H), jnp.float32)
    c = jnp.zeros((1, H), jnp.float32)

    # Fully unrolled recurrence (S is small and static) -> static slices, and the
    # LLO scheduler can overlap adjacent timesteps' independent work.
    for t in range(S):
        gates = gx[t:t + 1, :] + jnp.dot(
            h, whh_t, preferred_element_type=jnp.float32)    # (1, 4H)

        # One full-vreg tanh (EUP) replaces sigmoid + tanh:
        #   sigmoid(x) = 0.5 * tanh(0.5 * x) + 0.5
        th = jnp.tanh(gates * scale)
        acts = scale * th + offset                           # i/f/o: sigmoid, g: tanh

        i_g = acts[:, 0:H]
        f_g = acts[:, H:2 * H]
        g_g = acts[:, 2 * H:3 * H]
        o_g = acts[:, 3 * H:4 * H]

        c = f_g * c + i_g * g_g
        h = o_g * jnp.tanh(c)

        # Store is off the critical path (h does not depend on it).
        h_scratch[t:t + 1, :] = h

    # Post-loop: one (S,H)@(H,T) matmul + batched stable log_softmax + slab store.
    wtag_t = tag_slab_ref[0:H, :]              # (H, T)
    btag = tag_slab_ref[H:H + 1, :]            # (1, T)
    tag = (
        jnp.dot(h_scratch[...], wtag_t, preferred_element_type=jnp.float32)
        + btag
    )                                          # (S, T)
    m = jnp.max(tag, axis=1, keepdims=True)
    lse = m + jnp.log(jnp.sum(jnp.exp(tag - m), axis=1, keepdims=True))
    out_ref[...] = (tag - lse).astype(out_ref.dtype)


def pack_params(params):
    """One-time (outside the per-call jit path) packing of the tiny operands."""
    w_slab = jnp.concatenate(
        [
            jnp.transpose(params["w_ih"]),                       # (E, 4H)
            jnp.transpose(params["w_hh"]),                       # (H, 4H)
            (params["b_ih"] + params["b_hh"]).reshape(1, -1),    # (1, 4H)
        ],
        axis=0,
    )                                                            # (E+H+1, 4H)
    tag_slab = jnp.concatenate(
        [
            jnp.transpose(params["w_tag"]),                      # (H, T)
            params["b_tag"].reshape(1, -1),                      # (1, T)
        ],
        axis=0,
    )                                                            # (H+1, T)
    return {
        "embedding": params["embedding"],
        "w_slab": w_slab,
        "tag_slab": tag_slab,
    }


@jax.jit
def lstm_tagger_forward(sentence, packed):
    """sentence: (S,) int32 token ids. Returns (S, tagset_size) f32 log-probs."""
    # Embedding lookup (gather) stays in plain JAX glue outside the kernel.
    embeds = packed["embedding"][sentence]                       # (S, E)

    seq_len = embeds.shape[0]
    hidden = packed["w_slab"].shape[1] // 4
    tagset = packed["tag_slab"].shape[1]

    vmem_spec = pl.BlockSpec(memory_space=pltpu.MemorySpace.VMEM)

    return pl.pallas_call(
        lstm_tagger_kernel,
        out_shape=jax.ShapeDtypeStruct((seq_len, tagset), jnp.float32),
        in_specs=[vmem_spec] * 3,
        out_specs=vmem_spec,
        scratch_shapes=[
            pltpu.VMEM((seq_len, hidden), jnp.float32),          # h_scratch
        ],
    )(embeds, packed["w_slab"], packed["tag_slab"])


def reference_forward(sentence, params):
    """Pure-JAX reference mirroring torch semantics (gate order i,f,g,o)."""
    emb = params["embedding"][sentence]
    H = params["w_hh"].shape[1]
    h = jnp.zeros((1, H), jnp.float32)
    c = jnp.zeros((1, H), jnp.float32)
    outs = []
    for t in range(emb.shape[0]):
        x_t = emb[t:t + 1]
        gates = (x_t @ params["w_ih"].T + params["b_ih"]
                 + h @ params["w_hh"].T + params["b_hh"])
        i_g = jax.nn.sigmoid(gates[:, 0:H])
        f_g = jax.nn.sigmoid(gates[:, H:2 * H])
        g_g = jnp.tanh(gates[:, 2 * H:3 * H])
        o_g = jax.nn.sigmoid(gates[:, 3 * H:4 * H])
        c = f_g * c + i_g * g_g
        h = o_g * jnp.tanh(c)
        outs.append(h)
    lstm_out = jnp.concatenate(outs, axis=0)
    tag_space = lstm_out @ params["w_tag"].T + params["b_tag"]
    return jax.nn.log_softmax(tag_space, axis=1)


def init_params(key, vocab_size, embedding_dim, hidden_dim, tagset_size):
    ks = jax.random.split(key, 7)
    scale = 0.1
    return {
        "embedding": scale * jax.random.normal(ks[0], (vocab_size, embedding_dim), jnp.float32),
        "w_ih": scale * jax.random.normal(ks[1], (4 * hidden_dim, embedding_dim), jnp.float32),
        "w_hh": scale * jax.random.normal(ks[2], (4 * hidden_dim, hidden_dim), jnp.float32),
        "b_ih": scale * jax.random.normal(ks[3], (4 * hidden_dim,), jnp.float32),
        "b_hh": scale * jax.random.normal(ks[4], (4 * hidden_dim,), jnp.float32),
        "w_tag": scale * jax.random.normal(ks[5], (tagset_size, hidden_dim), jnp.float32),
        "b_tag": scale * jax.random.normal(ks[6], (tagset_size,), jnp.float32),
    }


if __name__ == "__main__":
    VOCAB = 16
    EMBED = 32
    HIDDEN = 32   # 4H = 128 -> gate vector exactly fills one 128-lane vreg row
    TAGSET = 8
    SEQ = 8

    key = jax.random.PRNGKey(0)
    pkey, skey = jax.random.split(key)
    params = init_params(pkey, VOCAB, EMBED, HIDDEN, TAGSET)
    sentence = jax.random.randint(skey, (SEQ,), 0, VOCAB, dtype=jnp.int32)

    packed = pack_params(params)           # one-time packing, outside the jit call path
    out = lstm_tagger_forward(sentence, packed)
    out = jax.block_until_ready(out)

    ref = reference_forward(sentence, params)
    assert out.shape == (SEQ, TAGSET)
    assert jnp.allclose(out, ref, atol=1e-5, rtol=1e-5), (
        f"max abs err {jnp.max(jnp.abs(out - ref))}")

    print("KERNEL_OK")
</pallas_src>

<mosaic_0001>
module attributes {stable_mosaic.version = 11 : i64} {
  func.func @lstm_tagger_kernel(%arg0: memref<8x32xf32, #tpu.memory_space<vmem>>, %arg1: memref<65x128xf32, #tpu.memory_space<vmem>>, %arg2: memref<33x8xf32, #tpu.memory_space<vmem>>, %arg3: memref<8x8xf32, #tpu.memory_space<vmem>>, %arg4: memref<8x32xf32, #tpu.memory_space<vmem>>) attributes {dimension_semantics = [], scalar_prefetch = 0 : i64, scratch_operands = 1 : i64, tpu.core_type = #tpu.core_type<tc>} {
    %c0 = arith.constant 0 : index
    %c0_0 = arith.constant 0 : index
    %0 = vector.load %arg1[%c0, %c0_0] : memref<65x128xf32, #tpu.memory_space<vmem>>, vector<32x128xf32>
    %c32 = arith.constant 32 : index
    %c0_1 = arith.constant 0 : index
    %1 = vector.load %arg1[%c32, %c0_1] : memref<65x128xf32, #tpu.memory_space<vmem>>, vector<32x128xf32>
    %c64 = arith.constant 64 : index
    %c0_2 = arith.constant 0 : index
    %2 = vector.load %arg1[%c64, %c0_2] : memref<65x128xf32, #tpu.memory_space<vmem>>, vector<1x128xf32>
    %c0_3 = arith.constant 0 : index
    %c0_4 = arith.constant 0 : index
    %3 = vector.load %arg0[%c0_3, %c0_4] : memref<8x32xf32, #tpu.memory_space<vmem>>, vector<8x32xf32>
    %cst = arith.constant dense<0.000000e+00> : vector<8x128xf32>
    %4 = tpu.matmul %3, %0, %cst {dimension_numbers = #tpu.dot_dimension_numbers<[1], [0], [0], [1], [0, 0, 1, 1], [], []>} : vector<8x32xf32>, vector<32x128xf32>, vector<8x128xf32> -> vector<8x128xf32>
    %5 = vector.broadcast %2 : vector<1x128xf32> to vector<8x128xf32>
    %6 = arith.addf %4, %5 : vector<8x128xf32>
    %7 = tpu.iota {dimensions = array<i32: 1>} : vector<1x128xi32>
    %c64_i32 = arith.constant 64 : i32
    %8 = vector.broadcast %c64_i32 : i32 to vector<1x128xi32>
    %9 = arith.cmpi sge, %7, %8 : vector<1x128xi32>
    %c96_i32 = arith.constant 96 : i32
    %10 = vector.broadcast %c96_i32 : i32 to vector<1x128xi32>
    %11 = arith.cmpi slt, %7, %10 : vector<1x128xi32>
    %12 = arith.andi %9, %11 : vector<1x128xi1>
    %cst_5 = arith.constant 1.000000e+00 : f32
    %cst_6 = arith.constant 5.000000e-01 : f32
    %13 = vector.broadcast %cst_5 : f32 to vector<1x128xf32>
    %14 = vector.broadcast %cst_6 : f32 to vector<1x128xf32>
    %15 = arith.select %12, %13, %14 : vector<1x128xi1>, vector<1x128xf32>
    %cst_7 = arith.constant 1.000000e+00 : f32
    %16 = vector.broadcast %cst_7 : f32 to vector<1x128xf32>
    %17 = arith.subf %16, %15 : vector<1x128xf32>
    %cst_8 = arith.constant 0.000000e+00 : f32
    %18 = vector.broadcast %cst_8 : f32 to vector<1x32xf32>
    %cst_9 = arith.constant 0.000000e+00 : f32
    %19 = vector.broadcast %cst_9 : f32 to vector<1x32xf32>
    %20 = vector.extract_strided_slice %6 {offsets = [0, 0], sizes = [1, 128], strides = [1, 1]} : vector<8x128xf32> to vector<1x128xf32>
    %cst_10 = arith.constant dense<0.000000e+00> : vector<1x128xf32>
    %21 = tpu.matmul %18, %1, %cst_10 {dimension_numbers = #tpu.dot_dimension_numbers<[1], [0], [0], [1], [0, 0, 1, 1], [], []>} : vector<1x32xf32>, vector<32x128xf32>, vector<1x128xf32> -> vector<1x128xf32>
    %22 = arith.addf %20, %21 : vector<1x128xf32>
    %23 = arith.mulf %22, %15 : vector<1x128xf32>
    %24 = math.tanh %23 : vector<1x128xf32>
    %25 = arith.mulf %15, %24 : vector<1x128xf32>
    %26 = arith.addf %25, %17 : vector<1x128xf32>
    %27 = vector.extract_strided_slice %26 {offsets = [0, 0], sizes = [1, 32], strides = [1, 1]} : vector<1x128xf32> to vector<1x32xf32>
    %28 = vector.extract_strided_slice %26 {offsets = [0, 32], sizes = [1, 32], strides = [1, 1]} : vector<1x128xf32> to vector<1x32xf32>
    %29 = vector.extract_strided_slice %26 {offsets = [0, 64], sizes = [1, 32], strides = [1, 1]} : vector<1x128xf32> to vector<1x32xf32>
    %30 = vector.extract_strided_slice %26 {offsets = [0, 96], sizes = [1, 32], strides = [1, 1]} : vector<1x128xf32> to vector<1x32xf32>
    %31 = arith.mulf %28, %19 : vector<1x32xf32>
    %32 = arith.mulf %27, %29 : vector<1x32xf32>
    %33 = arith.addf %31, %32 : vector<1x32xf32>
    %34 = math.tanh %33 : vector<1x32xf32>
    %35 = arith.mulf %30, %34 : vector<1x32xf32>
    %c0_11 = arith.constant 0 : index
    %c0_12 = arith.constant 0 : index
    %36 = vector.load %arg4[%c0_11, %c0_12] : memref<8x32xf32, #tpu.memory_space<vmem>>, vector<1x32xf32>
    tpu.vector_store %arg4[%c0_11, %c0_12], %35 {strides = array<i32>} : memref<8x32xf32, #tpu.memory_space<vmem>>, vector<1x32xf32>,
    %37 = vector.extract_strided_slice %6 {offsets = [1, 0], sizes = [1, 128], strides = [1, 1]} : vector<8x128xf32> to vector<1x128xf32>
    %cst_13 = arith.constant dense<0.000000e+00> : vector<1x128xf32>
    %38 = tpu.matmul %35, %1, %cst_13 {dimension_numbers = #tpu.dot_dimension_numbers<[1], [0], [0], [1], [0, 0, 1, 1], [], []>} : vector<1x32xf32>, vector<32x128xf32>, vector<1x128xf32> -> vector<1x128xf32>
    %39 = arith.addf %37, %38 : vector<1x128xf32>
    %40 = arith.mulf %39, %15 : vector<1x128xf32>
    %41 = math.tanh %40 : vector<1x128xf32>
    %42 = arith.mulf %15, %41 : vector<1x128xf32>
    %43 = arith.addf %42, %17 : vector<1x128xf32>
    %44 = vector.extract_strided_slice %43 {offsets = [0, 0], sizes = [1, 32], strides = [1, 1]} : vector<1x128xf32> to vector<1x32xf32>
    %45 = vector.extract_strided_slice %43 {offsets = [0, 32], sizes = [1, 32], strides = [1, 1]} : vector<1x128xf32> to vector<1x32xf32>
    %46 = vector.extract_strided_slice %43 {offsets = [0, 64], sizes = [1, 32], strides = [1, 1]} : vector<1x128xf32> to vector<1x32xf32>
    %47 = vector.extract_strided_slice %43 {offsets = [0, 96], sizes = [1, 32], strides = [1, 1]} : vector<1x128xf32> to vector<1x32xf32>
    %48 = arith.mulf %45, %33 : vector<1x32xf32>
    %49 = arith.mulf %44, %46 : vector<1x32xf32>
    %50 = arith.addf %48, %49 : vector<1x32xf32>
    %51 = math.tanh %50 : vector<1x32xf32>
    %52 = arith.mulf %47, %51 : vector<1x32xf32>
    %c1 = arith.constant 1 : index
    %c0_14 = arith.constant 0 : index
    %53 = vector.load %arg4[%c1, %c0_14] : memref<8x32xf32, #tpu.memory_space<vmem>>, vector<1x32xf32>
    tpu.vector_store %arg4[%c1, %c0_14], %52 {strides = array<i32>} : memref<8x32xf32, #tpu.memory_space<vmem>>, vector<1x32xf32>,
    %54 = vector.extract_strided_slice %6 {offsets = [2, 0], sizes = [1, 128], strides = [1, 1]} : vector<8x128xf32> to vector<1x128xf32>
    %cst_15 = arith.constant dense<0.000000e+00> : vector<1x128xf32>
    %55 = tpu.matmul %52, %1, %cst_15 {dimension_numbers = #tpu.dot_dimension_numbers<[1], [0], [0], [1], [0, 0, 1, 1], [], []>} : vector<1x32xf32>, vector<32x128xf32>, vector<1x128xf32> -> vector<1x128xf32>
    %56 = arith.addf %54, %55 : vector<1x128xf32>
    %57 = arith.mulf %56, %15 : vector<1x128xf32>
    %58 = math.tanh %57 : vector<1x128xf32>
    %59 = arith.mulf %15, %58 : vector<1x128xf32>
    %60 = arith.addf %59, %17 : vector<1x128xf32>
    %61 = vector.extract_strided_slice %60 {offsets = [0, 0], sizes = [1, 32], strides = [1, 1]} : vector<1x128xf32> to vector<1x32xf32>
    %62 = vector.extract_strided_slice %60 {offsets = [0, 32], sizes = [1, 32], strides = [1, 1]} : vector<1x128xf32> to vector<1x32xf32>
    %63 = vector.extract_strided_slice %60 {offsets = [0, 64], sizes = [1, 32], strides = [1, 1]} : vector<1x128xf32> to vector<1x32xf32>
    %64 = vector.extract_strided_slice %60 {offsets = [0, 96], sizes = [1, 32], strides = [1, 1]} : vector<1x128xf32> to vector<1x32xf32>
    %65 = arith.mulf %62, %50 : vector<1x32xf32>
    %66 = arith.mulf %61, %63 : vector<1x32xf32>
    %67 = arith.addf %65, %66 : vector<1x32xf32>
    %68 = math.tanh %67 : vector<1x32xf32>
    %69 = arith.mulf %64, %68 : vector<1x32xf32>
    %c2 = arith.constant 2 : index
    %c0_16 = arith.constant 0 : index
    %70 = vector.load %arg4[%c2, %c0_16] : memref<8x32xf32, #tpu.memory_space<vmem>>, vector<1x32xf32>
    tpu.vector_store %arg4[%c2, %c0_16], %69 {strides = array<i32>} : memref<8x32xf32, #tpu.memory_space<vmem>>, vector<1x32xf32>,
    %71 = vector.extract_strided_slice %6 {offsets = [3, 0], sizes = [1, 128], strides = [1, 1]} : vector<8x128xf32> to vector<1x128xf32>
    %cst_17 = arith.constant dense<0.000000e+00> : vector<1x128xf32>
    %72 = tpu.matmul %69, %1, %cst_17 {dimension_numbers = #tpu.dot_dimension_numbers<[1], [0], [0], [1], [0, 0, 1, 1], [], []>} : vector<1x32xf32>, vector<32x128xf32>, vector<1x128xf32> -> vector<1x128xf32>
    %73 = arith.addf %71, %72 : vector<1x128xf32>
    %74 = arith.mulf %73, %15 : vector<1x128xf32>
    %75 = math.tanh %74 : vector<1x128xf32>
    %76 = arith.mulf %15, %75 : vector<1x128xf32>
    %77 = arith.addf %76, %17 : vector<1x128xf32>
    %78 = vector.extract_strided_slice %77 {offsets = [0, 0], sizes = [1, 32], strides = [1, 1]} : vector<1x128xf32> to vector<1x32xf32>
    %79 = vector.extract_strided_slice %77 {offsets = [0, 32], sizes = [1, 32], strides = [1, 1]} : vector<1x128xf32> to vector<1x32xf32>
    %80 = vector.extract_strided_slice %77 {offsets = [0, 64], sizes = [1, 32], strides = [1, 1]} : vector<1x128xf32> to vector<1x32xf32>
    %81 = vector.extract_strided_slice %77 {offsets = [0, 96], sizes = [1, 32], strides = [1, 1]} : vector<1x128xf32> to vector<1x32xf32>
    %82 = arith.mulf %79, %67 : vector<1x32xf32>
    %83 = arith.mulf %78, %80 : vector<1x32xf32>
    %84 = arith.addf %82, %83 : vector<1x32xf32>
    %85 = math.tanh %84 : vector<1x32xf32>
    %86 = arith.mulf %81, %85 : vector<1x32xf32>
    %c3 = arith.constant 3 : index
    %c0_18 = arith.constant 0 : index
    %87 = vector.load %arg4[%c3, %c0_18] : memref<8x32xf32, #tpu.memory_space<vmem>>, vector<1x32xf32>
    tpu.vector_store %arg4[%c3, %c0_18], %86 {strides = array<i32>} : memref<8x32xf32, #tpu.memory_space<vmem>>, vector<1x32xf32>,
    %88 = vector.extract_strided_slice %6 {offsets = [4, 0], sizes = [1, 128], strides = [1, 1]} : vector<8x128xf32> to vector<1x128xf32>
    %cst_19 = arith.constant dense<0.000000e+00> : vector<1x128xf32>
    %89 = tpu.matmul %86, %1, %cst_19 {dimension_numbers = #tpu.dot_dimension_numbers<[1], [0], [0], [1], [0, 0, 1, 1], [], []>} : vector<1x32xf32>, vector<32x128xf32>, vector<1x128xf32> -> vector<1x128xf32>
    %90 = arith.addf %88, %89 : vector<1x128xf32>
    %91 = arith.mulf %90, %15 : vector<1x128xf32>
    %92 = math.tanh %91 : vector<1x128xf32>
    %93 = arith.mulf %15, %92 : vector<1x128xf32>
    %94 = arith.addf %93, %17 : vector<1x128xf32>
    %95 = vector.extract_strided_slice %94 {offsets = [0, 0], sizes = [1, 32], strides = [1, 1]} : vector<1x128xf32> to vector<1x32xf32>
    %96 = vector.extract_strided_slice %94 {offsets = [0, 32], sizes = [1, 32], strides = [1, 1]} : vector<1x128xf32> to vector<1x32xf32>
    %97 = vector.extract_strided_slice %94 {offsets = [0, 64], sizes = [1, 32], strides = [1, 1]} : vector<1x128xf32> to vector<1x32xf32>
    %98 = vector.extract_strided_slice %94 {offsets = [0, 96], sizes = [1, 32], strides = [1, 1]} : vector<1x128xf32> to vector<1x32xf32>
    %99 = arith.mulf %96, %84 : vector<1x32xf32>
    %100 = arith.mulf %95, %97 : vector<1x32xf32>
    %101 = arith.addf %99, %100 : vector<1x32xf32>
    %102 = math.tanh %101 : vector<1x32xf32>
    %103 = arith.mulf %98, %102 : vector<1x32xf32>
    %c4 = arith.constant 4 : index
    %c0_20 = arith.constant 0 : index
    %104 = vector.load %arg4[%c4, %c0_20] : memref<8x32xf32, #tpu.memory_space<vmem>>, vector<1x32xf32>
    tpu.vector_store %arg4[%c4, %c0_20], %103 {strides = array<i32>} : memref<8x32xf32, #tpu.memory_space<vmem>>, vector<1x32xf32>,
    %105 = vector.extract_strided_slice %6 {offsets = [5, 0], sizes = [1, 128], strides = [1, 1]} : vector<8x128xf32> to vector<1x128xf32>
    %cst_21 = arith.constant dense<0.000000e+00> : vector<1x128xf32>
    %106 = tpu.matmul %103, %1, %cst_21 {dimension_numbers = #tpu.dot_dimension_numbers<[1], [0], [0], [1], [0, 0, 1, 1], [], []>} : vector<1x32xf32>, vector<32x128xf32>, vector<1x128xf32> -> vector<1x128xf32>
    %107 = arith.addf %105, %106 : vector<1x128xf32>
    %108 = arith.mulf %107, %15 : vector<1x128xf32>
    %109 = math.tanh %108 : vector<1x128xf32>
    %110 = arith.mulf %15, %109 : vector<1x128xf32>
    %111 = arith.addf %110, %17 : vector<1x128xf32>
    %112 = vector.extract_strided_slice %111 {offsets = [0, 0], sizes = [1, 32], strides = [1, 1]} : vector<1x128xf32> to vector<1x32xf32>
    %113 = vector.extract_strided_slice %111 {offsets = [0, 32], sizes = [1, 32], strides = [1, 1]} : vector<1x128xf32> to vector<1x32xf32>
    %114 = vector.extract_strided_slice %111 {offsets = [0, 64], sizes = [1, 32], strides = [1, 1]} : vector<1x128xf32> to vector<1x32xf32>
    %115 = vector.extract_strided_slice %111 {offsets = [0, 96], sizes = [1, 32], strides = [1, 1]} : vector<1x128xf32> to vector<1x32xf32>
    %116 = arith.mulf %113, %101 : vector<1x32xf32>
    %117 = arith.mulf %112, %114 : vector<1x32xf32>
    %118 = arith.addf %116, %117 : vector<1x32xf32>
    %119 = math.tanh %118 : vector<1x32xf32>
    %120 = arith.mulf %115, %119 : vector<1x32xf32>
    %c5 = arith.constant 5 : index
    %c0_22 = arith.constant 0 : index
    %121 = vector.load %arg4[%c5, %c0_22] : memref<8x32xf32, #tpu.memory_space<vmem>>, vector<1x32xf32>
    tpu.vector_store %arg4[%c5, %c0_22], %120 {strides = array<i32>} : memref<8x32xf32, #tpu.memory_space<vmem>>, vector<1x32xf32>,
    %122 = vector.extract_strided_slice %6 {offsets = [6, 0], sizes = [1, 128], strides = [1, 1]} : vector<8x128xf32> to vector<1x128xf32>
    %cst_23 = arith.constant dense<0.000000e+00> : vector<1x128xf32>
    %123 = tpu.matmul %120, %1, %cst_23 {dimension_numbers = #tpu.dot_dimension_numbers<[1], [0], [0], [1], [0, 0, 1, 1], [], []>} : vector<1x32xf32>, vector<32x128xf32>, vector<1x128xf32> -> vector<1x128xf32>
    %124 = arith.addf %122, %123 : vector<1x128xf32>
    %125 = arith.mulf %124, %15 : vector<1x128xf32>
    %126 = math.tanh %125 : vector<1x128xf32>
    %127 = arith.mulf %15, %126 : vector<1x128xf32>
    %128 = arith.addf %127, %17 : vector<1x128xf32>
    %129 = vector.extract_strided_slice %128 {offsets = [0, 0], sizes = [1, 32], strides = [1, 1]} : vector<1x128xf32> to vector<1x32xf32>
    %130 = vector.extract_strided_slice %128 {offsets = [0, 32], sizes = [1, 32], strides = [1, 1]} : vector<1x128xf32> to vector<1x32xf32>
    %131 = vector.extract_strided_slice %128 {offsets = [0, 64], sizes = [1, 32], strides = [1, 1]} : vector<1x128xf32> to vector<1x32xf32>
    %132 = vector.extract_strided_slice %128 {offsets = [0, 96], sizes = [1, 32], strides = [1, 1]} : vector<1x128xf32> to vector<1x32xf32>
    %133 = arith.mulf %130, %118 : vector<1x32xf32>
    %134 = arith.mulf %129, %131 : vector<1x32xf32>
    %135 = arith.addf %133, %134 : vector<1x32xf32>
    %136 = math.tanh %135 : vector<1x32xf32>
    %137 = arith.mulf %132, %136 : vector<1x32xf32>
    %c6 = arith.constant 6 : index
    %c0_24 = arith.constant 0 : index
    %138 = vector.load %arg4[%c6, %c0_24] : memref<8x32xf32, #tpu.memory_space<vmem>>, vector<1x32xf32>
    tpu.vector_store %arg4[%c6, %c0_24], %137 {strides = array<i32>} : memref<8x32xf32, #tpu.memory_space<vmem>>, vector<1x32xf32>,
    %139 = vector.extract_strided_slice %6 {offsets = [7, 0], sizes = [1, 128], strides = [1, 1]} : vector<8x128xf32> to vector<1x128xf32>
    %cst_25 = arith.constant dense<0.000000e+00> : vector<1x128xf32>
    %140 = tpu.matmul %137, %1, %cst_25 {dimension_numbers = #tpu.dot_dimension_numbers<[1], [0], [0], [1], [0, 0, 1, 1], [], []>} : vector<1x32xf32>, vector<32x128xf32>, vector<1x128xf32> -> vector<1x128xf32>
    %141 = arith.addf %139, %140 : vector<1x128xf32>
    %142 = arith.mulf %141, %15 : vector<1x128xf32>
    %143 = math.tanh %142 : vector<1x128xf32>
    %144 = arith.mulf %15, %143 : vector<1x128xf32>
    %145 = arith.addf %144, %17 : vector<1x128xf32>
    %146 = vector.extract_strided_slice %145 {offsets = [0, 0], sizes = [1, 32], strides = [1, 1]} : vector<1x128xf32> to vector<1x32xf32>
    %147 = vector.extract_strided_slice %145 {offsets = [0, 32], sizes = [1, 32], strides = [1, 1]} : vector<1x128xf32> to vector<1x32xf32>
    %148 = vector.extract_strided_slice %145 {offsets = [0, 64], sizes = [1, 32], strides = [1, 1]} : vector<1x128xf32> to vector<1x32xf32>
    %149 = vector.extract_strided_slice %145 {offsets = [0, 96], sizes = [1, 32], strides = [1, 1]} : vector<1x128xf32> to vector<1x32xf32>
    %150 = arith.mulf %147, %135 : vector<1x32xf32>
    %151 = arith.mulf %146, %148 : vector<1x32xf32>
    %152 = arith.addf %150, %151 : vector<1x32xf32>
    %153 = math.tanh %152 : vector<1x32xf32>
    %154 = arith.mulf %149, %153 : vector<1x32xf32>
    %c7 = arith.constant 7 : index
    %c0_26 = arith.constant 0 : index
    %155 = vector.load %arg4[%c7, %c0_26] : memref<8x32xf32, #tpu.memory_space<vmem>>, vector<1x32xf32>
    tpu.vector_store %arg4[%c7, %c0_26], %154 {strides = array<i32>} : memref<8x32xf32, #tpu.memory_space<vmem>>, vector<1x32xf32>,
    %c0_27 = arith.constant 0 : index
    %c0_28 = arith.constant 0 : index
    %156 = vector.load %arg2[%c0_27, %c0_28] : memref<33x8xf32, #tpu.memory_space<vmem>>, vector<32x8xf32>
    %c32_29 = arith.constant 32 : index
    %c0_30 = arith.constant 0 : index
    %157 = vector.load %arg2[%c32_29, %c0_30] : memref<33x8xf32, #tpu.memory_space<vmem>>, vector<1x8xf32>
    %c0_31 = arith.constant 0 : index
    %c0_32 = arith.constant 0 : index
    %158 = vector.load %arg4[%c0_31, %c0_32] : memref<8x32xf32, #tpu.memory_space<vmem>>, vector<8x32xf32>
    %cst_33 = arith.constant dense<0.000000e+00> : vector<8x8xf32>
    %159 = tpu.matmul %158, %156, %cst_33 {dimension_numbers = #tpu.dot_dimension_numbers<[1], [0], [0], [1], [0, 0, 1, 1], [], []>} : vector<8x32xf32>, vector<32x8xf32>, vector<8x8xf32> -> vector<8x8xf32>
    %160 = vector.broadcast %157 : vector<1x8xf32> to vector<8x8xf32>
    %161 = arith.addf %159, %160 : vector<8x8xf32>
    %cst_34 = arith.constant dense<0xFF800000> : vector<8xf32>
    %162 = vector.multi_reduction <maximumf>, %161, %cst_34 [1] : vector<8x8xf32> to vector<8xf32>
    %163 = vector.shape_cast %162 : vector<8xf32> to vector<8x1xf32>
    %164 = vector.broadcast %163 : vector<8x1xf32> to vector<8x8xf32>
    %165 = arith.subf %161, %164 : vector<8x8xf32>
    %166 = math.exp %165 : vector<8x8xf32>
    %cst_35 = arith.constant dense<0.000000e+00> : vector<8xf32>
    %167 = vector.multi_reduction <add>, %166, %cst_35 [1] : vector<8x8xf32> to vector<8xf32>
    %168 = vector.shape_cast %167 : vector<8xf32> to vector<8x1xf32>
    %169 = math.log %168 : vector<8x1xf32>
    %170 = arith.addf %163, %169 : vector<8x1xf32>
    %171 = vector.broadcast %170 : vector<8x1xf32> to vector<8x8xf32>
    %172 = arith.subf %161, %171 : vector<8x8xf32>
    %c0_36 = arith.constant 0 : index
    %c0_37 = arith.constant 0 : index
    %173 = vector.load %arg3[%c0_36, %c0_37] : memref<8x8xf32, #tpu.memory_space<vmem>>, vector<8x8xf32>
    tpu.vector_store %arg3[%c0_36, %c0_37], %172 {strides = array<i32>} : memref<8x8xf32, #tpu.memory_space<vmem>>, vector<8x8xf32>,
    return
  }
}

</mosaic_0001>

<llo_original>
// kernel: lstm_tagger_forward.1
$region0: #{lstm_tagger_forward.1}
  #allocation0 [shape = 'u32[]', space=smem, size = 0x4, offset = 0x4, fixed_abs, tag = 'smem constant byte address 0x4 - core index']
  #allocation1 [shape = 'u32[144,128]{1,0:T(1,128)}', space=vmem, size = 0x12000, scoped, tag = 'internal scratch']
  #allocation2 [shape = 'f32[8,32]{1,0:T(8,128)}', space=vmem, size = 0x1000, scoped, tag = 'scratch operand']
  %s0 = inlined_call_operand.vmem [shape: f32[8,32], index: 0, kind: input, shape index: {}]
  %s1 = inlined_call_operand.vmem [shape: f32[65,128], index: 1, kind: input, shape index: {}]
  %s2 = inlined_call_operand.vmem [shape: f32[33,8], index: 2, kind: input, shape index: {}]
  %s3 = inlined_call_operand.hbm [shape: f32[8,8], index: 3, kind: output, shape index: {}]
  %s4 = sld [smem:[#allocation0]]
  $region22: #{lstm_tagger_forward.1} parent=0
    _
  %s6 = ssub.s32 1, %s4
  %s7 = scalar_select 0, %s6, %s4
  $region1: #{lstm_tagger_forward.1} parent=0
    #allocation3 [shape = 'u8[4096]{0}', space=vmem, size = 0x1000, scoped, tag = 'output window, operand 0, single buffered']
    #allocation4 [shape = 's32[1]{0}', space=sflag, size = 0x4, scoped, tag = 'scoped memory for lstm_tagger_forward.1']
    %8 = vsyncpa [#allocation4], 0
    // Predicated region
    $region2: #{lstm_tagger_forward.1} parent=1 // pred_check
      _
    $region3: #{lstm_tagger_forward.1} parent=1 // pred_check_branch
      %10 = sbr.rel (0) target = $region5
    $region4: #{lstm_tagger_forward.1} parent=1 // pred_region
      _
    $region5: #{lstm_tagger_forward.1} parent=1 // pred_fallthru
      _
    // Predicated region
    $region6: #{lstm_tagger_forward.1} parent=1 // pred_check
      _
    $region7: #{lstm_tagger_forward.1} parent=1 // pred_check_branch
      %12 = sbr.rel (0) target = $region9
    $region8: #{lstm_tagger_forward.1} parent=1 // pred_region
      _
    $region9: #{lstm_tagger_forward.1} parent=1 // pred_fallthru
      _
    // Predicated region
    $region10: #{lstm_tagger_forward.1} parent=1 // pred_check
      _
    $region11: #{lstm_tagger_forward.1} parent=1 // pred_check_branch
      %14 = sbr.rel (0) target = $region13
    $region12: #{lstm_tagger_forward.1} parent=1 // pred_region
      _
    $region13: #{lstm_tagger_forward.1} parent=1 // pred_fallthru
      _
    %v15 = vld [vmem:[%s1] sm:$0xff]
    %v16 = vld [vmem:[%s1 + $0x8] sm:$0xff]
    %v17 = vld [vmem:[%s1 + $0x10] sm:$0xff]
    %v18 = vld [vmem:[%s1 + $0x18] sm:$0xff]
    %v19 = vld [vmem:[%s1 + $0x20] sm:$0xff]
    %v20 = vld [vmem:[%s1 + $0x28] sm:$0xff]
    %v21 = vld [vmem:[%s1 + $0x30] sm:$0xff]
    %v22 = vld [vmem:[%s1 + $0x38] sm:$0xff]
    %v23 = vld [vmem:[%s1 + $0x40] sm:$0x1]
    %v24 = vld [vmem:[%s0] sm:$0xff]
    %v25 = vlaneseq
    %v26 = vshrl.u32 %v25, 7
    %v27 = vsub.s32 0, %v26
    %v28 = vrot.slane %v23, %v27
    %vm29 = vcmask 261120
    %v31 = vsel %vm29, %v24, 0
    %33 = vmatprep.subr.mxu0 0.0
    %34 = vmatpush1.msra.mxu0 0.0
    %35 = vmatprep.subr.mxu0 0.0
    %36 = vmatpush1.msra.mxu0 0.0
    %37 = vmatprep.subr.mxu0 0.0
    %38 = vmatpush1.msra.mxu0 0.0
    %39 = vmatprep.subr.mxu0 0.0
    %40 = vmatpush1.msra.mxu0 0.0
    %41 = vmatprep.subr.mxu0 0.0
    %42 = vmatpush1.msra.mxu0 0.0
    %43 = vmatprep.subr.mxu0 0.0
    %44 = vmatpush1.msra.mxu0 0.0
    %45 = vmatprep.subr.mxu0 0.0
    %46 = vmatpush1.msra.mxu0 0.0
    %47 = vmatprep.subr.mxu0 0.0
    %48 = vmatpush1.msra.mxu0 0.0
    %49 = vmatprep.subr.mxu0 0.0
    %50 = vmatpush1.msra.mxu0 0.0
    %51 = vmatprep.subr.mxu0 0.0
    %52 = vmatpush1.msra.mxu0 0.0
    %53 = vmatprep.subr.mxu0 0.0
    %54 = vmatpush1.msra.mxu0 0.0
    %55 = vmatprep.subr.mxu0 0.0
    %56 = vmatpush1.msra.mxu0 0.0
    %57 = vmatprep.subr.mxu0 0.0
    %58 = vmatpush1.msra.mxu0 %v18
    %59 = vmatprep.subr.mxu0 0.0
    %60 = vmatpush1.msra.mxu0 %v17
    %61 = vmatprep.subr.mxu0 0.0
    %62 = vmatpush1.msra.mxu0 %v16
    %63 = vmatprep.subr.mxu0 0.0
    %64 = vmatpush1.msra.mxu0 %v15
    %65 = vmatprep.subr.mxu0 0.0
    %66 = vmatpush2.msra.mxu0 0.0
    %67 = vmatprep.subr.mxu0 0.0
    %68 = vmatpush2.msra.mxu0 0.0
    %69 = vmatprep.subr.mxu0 0.0
    %70 = vmatpush2.msra.mxu0 0.0
    %71 = vmatprep.subr.mxu0 0.0
    %72 = vmatpush2.msra.mxu0 0.0
    %73 = vmatprep.subr.mxu0 0.0
    %74 = vmatpush2.msra.mxu0 0.0
    %75 = vmatprep.subr.mxu0 0.0
    %76 = vmatpush2.msra.mxu0 0.0
    %77 = vmatprep.subr.mxu0 0.0
    %78 = vmatpush2.msra.mxu0 0.0
    %79 = vmatprep.subr.mxu0 0.0
    %80 = vmatpush2.msra.mxu0 0.0
    %81 = vmatprep.subr.mxu0 0.0
    %82 = vmatpush2.msra.mxu0 0.0
    %83 = vmatprep.subr.mxu0 0.0
    %84 = vmatpush2.msra.mxu0 0.0
    %85 = vmatprep.subr.mxu0 0.0
    %86 = vmatpush2.msra.mxu0 0.0
    %87 = vmatprep.subr.mxu0 0.0
    %88 = vmatpush2.msra.mxu0 0.0
    %89 = vmatprep.subr.mxu0 0.0
    %90 = vmatpush2.msra.mxu0 0.0
    %91 = vmatprep.subr.mxu0 0.0
    %92 = vmatpush2.msra.mxu0 0.0
    %93 = vmatprep.subr.mxu0 0.0
    %94 = vmatpush2.msra.mxu0 0.0
    %95 = vmatprep.subr.mxu0 0.0
    %96 = vmatpush2.msra.mxu0 0.0
    %97 = vmatprep.mubr.f32.mxu0 0.0
    %98 = vmatmul.mubr.f32.gmra.mxu0 %v31
    %v99 = vpop.f32.mrf.mxu0
    %v100 = vadd.f32 %v28, %v99
    %v101 = vpop.f32.mrf.mxu0
    %102 = vdwg.mxu0
    %v103 = vlaneseq
    %v104 = vand.u32 %v103, 127
    %vm105 = vcmp.ge.s32.totalorder %v104, 64
    %vm106 = vcmp.lt.s32.totalorder %v104, 96
    %vm107 = vmand %vm105, %vm106
    %v108 = vsel %vm107, 1.0, 0.5
    %v109 = vsub.f32 1.0, %v108
    %v111 = vsel %vm29, 0.0, 0
    %113 = vmatprep.subr.mxu0 0.0
    %114 = vmatpush1.msra.mxu0 0.0
    %115 = vmatprep.subr.mxu0 0.0
    %116 = vmatpush1.msra.mxu0 0.0
    %117 = vmatprep.subr.mxu0 0.0
    %118 = vmatpush1.msra.mxu0 0.0
    %119 = vmatprep.subr.mxu0 0.0
    %120 = vmatpush1.msra.mxu0 0.0
    %121 = vmatprep.subr.mxu0 0.0
    %122 = vmatpush1.msra.mxu0 0.0
    %123 = vmatprep.subr.mxu0 0.0
    %124 = vmatpush1.msra.mxu0 0.0
    %125 = vmatprep.subr.mxu0 0.0
    %126 = vmatpush1.msra.mxu0 0.0
    %127 = vmatprep.subr.mxu0 0.0
    %128 = vmatpush1.msra.mxu0 0.0
    %129 = vmatprep.subr.mxu0 0.0
    %130 = vmatpush1.msra.mxu0 0.0
    %131 = vmatprep.subr.mxu0 0.0
    %132 = vmatpush1.msra.mxu0 0.0
    %133 = vmatprep.subr.mxu0 0.0
    %134 = vmatpush1.msra.mxu0 0.0
    %135 = vmatprep.subr.mxu0 0.0
    %136 = vmatpush1.msra.mxu0 0.0
    %137 = vmatprep.subr.mxu0 0.0
    %138 = vmatpush1.msra.mxu0 %v22
    %139 = vmatprep.subr.mxu0 0.0
    %140 = vmatpush1.msra.mxu0 %v21
    %141 = vmatprep.subr.mxu0 0.0
    %142 = vmatpush1.msra.mxu0 %v20
    %143 = vmatprep.subr.mxu0 0.0
    %144 = vmatpush1.msra.mxu0 %v19
    %145 = vmatprep.subr.mxu0 0.0
    %146 = vmatpush2.msra.mxu0 0.0
    %147 = vmatprep.subr.mxu0 0.0
    %148 = vmatpush2.msra.mxu0 0.0
    %149 = vmatprep.subr.mxu0 0.0
    %150 = vmatpush2.msra.mxu0 0.0
    %151 = vmatprep.subr.mxu0 0.0
    %152 = vmatpush2.msra.mxu0 0.0
    %153 = vmatprep.subr.mxu0 0.0
    %154 = vmatpush2.msra.mxu0 0.0
    %155 = vmatprep.subr.mxu0 0.0
    %156 = vmatpush2.msra.mxu0 0.0
    %157 = vmatprep.subr.mxu0 0.0
    %158 = vmatpush2.msra.mxu0 0.0
    %159 = vmatprep.subr.mxu0 0.0
    %160 = vmatpush2.msra.mxu0 0.0
    %161 = vmatprep.subr.mxu0 0.0
    %162 = vmatpush2.msra.mxu0 0.0
    %163 = vmatprep.subr.mxu0 0.0
    %164 = vmatpush2.msra.mxu0 0.0
    %165 = vmatprep.subr.mxu0 0.0
    %166 = vmatpush2.msra.mxu0 0.0
    %167 = vmatprep.subr.mxu0 0.0
    %168 = vmatpush2.msra.mxu0 0.0
    %169 = vmatprep.subr.mxu0 0.0
    %170 = vmatpush2.msra.mxu0 0.0
    %171 = vmatprep.subr.mxu0 0.0
    %172 = vmatpush2.msra.mxu0 0.0
    %173 = vmatprep.subr.mxu0 0.0
    %174 = vmatpush2.msra.mxu0 0.0
    %175 = vmatprep.subr.mxu0 0.0
    %176 = vmatpush2.msra.mxu0 0.0
    %177 = vmatprep.mubr.f32.mxu0 0.0
    %178 = vmatmul.mubr.f32.gmra.mxu0 %v111
    %v179 = vpop.f32.mrf.mxu0
    %v180 = vadd.f32 0.0, %v179
    %v181 = vpop.f32.mrf.mxu0
    %182 = vdwg.mxu0
    %v183 = vadd.f32 %v100, %v180
    %v184 = vmul.f32 %v183, %v108
    %v185 = vtanh.pop %v184
    %v186 = vmul.f32 %v108, %v185
    %v187 = vadd.f32 %v186, %v109
    %v188 = vmul.f32 %v187, 0.0
    %190 = vrot.lane.b32.xlu0 %v187, 64
    %v191 = vpop.permute.xlu0 %190
    %v193 = vmul.f32 %v187, %v191
    %195 = vrot.lane.b32.xlu0 %v193, 32
    %v196 = vpop.permute.xlu0 %195
    %v198 = vadd.f32 %v188, %v196
    %v199 = vtanh.pop %v198
    %201 = vrot.lane.b32.xlu0 %v199, 64
    %v202 = vpop.permute.xlu0 %201
    %v204 = vmul.f32 %v187, %v202
    %206 = vrot.lane.b32.xlu0 %v204, 32
    %v207 = vpop.permute.xlu0 %206
    %vm209 = vcmask 253952
    %210 = vst.msk [vmem:[#allocation2] sm:$0x1] %vm209, %v207
    %v211 = vsel %vm29, %v207, 0
    %213 = vmatprep.subr.mxu0 0.0
    %214 = vmatpush1.msra.mxu0 0.0
    %215 = vmatprep.subr.mxu0 0.0
    %216 = vmatpush1.msra.mxu0 0.0
    %217 = vmatprep.subr.mxu0 0.0
    %218 = vmatpush1.msra.mxu0 0.0
    %219 = vmatprep.subr.mxu0 0.0
    %220 = vmatpush1.msra.mxu0 0.0
    %221 = vmatprep.subr.mxu0 0.0
    %222 = vmatpush1.msra.mxu0 0.0
    %223 = vmatprep.subr.mxu0 0.0
    %224 = vmatpush1.msra.mxu0 0.0
    %225 = vmatprep.subr.mxu0 0.0
    %226 = vmatpush1.msra.mxu0 0.0
    %227 = vmatprep.subr.mxu0 0.0
    %228 = vmatpush1.msra.mxu0 0.0
    %229 = vmatprep.subr.mxu0 0.0
    %230 = vmatpush1.msra.mxu0 0.0
    %231 = vmatprep.subr.mxu0 0.0
    %232 = vmatpush1.msra.mxu0 0.0
    %233 = vmatprep.subr.mxu0 0.0
    %234 = vmatpush1.msra.mxu0 0.0
    %235 = vmatprep.subr.mxu0 0.0
    %236 = vmatpush1.msra.mxu0 0.0
    %237 = vmatprep.subr.mxu0 0.0
    %238 = vmatpush1.msra.mxu0 %v22
    %239 = vmatprep.subr.mxu0 0.0
    %240 = vmatpush1.msra.mxu0 %v21
    %241 = vmatprep.subr.mxu0 0.0
    %242 = vmatpush1.msra.mxu0 %v20
    %243 = vmatprep.subr.mxu0 0.0
    %244 = vmatpush1.msra.mxu0 %v19
    %245 = vmatprep.subr.mxu0 0.0
    %246 = vmatpush2.msra.mxu0 0.0
    %247 = vmatprep.subr.mxu0 0.0
    %248 = vmatpush2.msra.mxu0 0.0
    %249 = vmatprep.subr.mxu0 0.0
    %250 = vmatpush2.msra.mxu0 0.0
    %251 = vmatprep.subr.mxu0 0.0
    %252 = vmatpush2.msra.mxu0 0.0
    %253 = vmatprep.subr.mxu0 0.0
    %254 = vmatpush2.msra.mxu0 0.0
    %255 = vmatprep.subr.mxu0 0.0
    %256 = vmatpush2.msra.mxu0 0.0
    %257 = vmatprep.subr.mxu0 0.0
    %258 = vmatpush2.msra.mxu0 0.0
    %259 = vmatprep.subr.mxu0 0.0
    %260 = vmatpush2.msra.mxu0 0.0
    %261 = vmatprep.subr.mxu0 0.0
    %262 = vmatpush2.msra.mxu0 0.0
    %263 = vmatprep.subr.mxu0 0.0
    %264 = vmatpush2.msra.mxu0 0.0
    %265 = vmatprep.subr.mxu0 0.0
    %266 = vmatpush2.msra.mxu0 0.0
    %267 = vmatprep.subr.mxu0 0.0
    %268 = vmatpush2.msra.mxu0 0.0
    %269 = vmatprep.subr.mxu0 0.0
    %270 = vmatpush2.msra.mxu0 0.0
    %271 = vmatprep.subr.mxu0 0.0
    %272 = vmatpush2.msra.mxu0 0.0
    %273 = vmatprep.subr.mxu0 0.0
    %274 = vmatpush2.msra.mxu0 0.0
    %275 = vmatprep.subr.mxu0 0.0
    %276 = vmatpush2.msra.mxu0 0.0
    %277 = vmatprep.mubr.f32.mxu0 0.0
    %278 = vmatmul.mubr.f32.gmra.mxu0 %v211
    %v279 = vpop.f32.mrf.mxu0
    %v280 = vadd.f32 0.0, %v279
    %v281 = vpop.f32.mrf.mxu0
    %282 = vdwg.mxu0
    %v284 = vrot.slane %v280, 7
    %v286 = vadd.f32 %v100, %v284
    %v287 = vmul.f32 %v286, %v108
    %v288 = vtanh.pop %v287
    %v289 = vmul.f32 %v108, %v288
    %v290 = vadd.f32 %v289, %v109
    %v292 = vrot.slane %v198, 7
    %v294 = vmul.f32 %v290, %v292
    %296 = vrot.lane.b32.xlu0 %v290, 64
    %v297 = vpop.permute.xlu0 %296
    %v299 = vmul.f32 %v290, %v297
    %301 = vrot.lane.b32.xlu0 %v299, 32
    %v302 = vpop.permute.xlu0 %301
    %v304 = vadd.f32 %v294, %v302
    %v305 = vtanh.pop %v304
    %307 = vrot.lane.b32.xlu0 %v305, 64
    %v308 = vpop.permute.xlu0 %307
    %v310 = vmul.f32 %v290, %v308
    %312 = vrot.lane.b32.xlu0 %v310, 32
    %v313 = vpop.permute.xlu0 %312
    %vm315 = vcmask 254977
    %316 = vst.msk [vmem:[#allocation2] sm:$0x2] %vm315, %v313
    %v317 = vrot.slane %v310, 1
    %318 = vrot.lane.b32.xlu0 %v317, 32
    %v319 = vpop.permute.xlu0 %318
    %v320 = vsel %vm29, %v319, 0
    %322 = vmatprep.subr.mxu0 0.0
    %323 = vmatpush1.msra.mxu0 0.0
    %324 = vmatprep.subr.mxu0 0.0
    %325 = vmatpush1.msra.mxu0 0.0
    %326 = vmatprep.subr.mxu0 0.0
    %327 = vmatpush1.msra.mxu0 0.0
    %328 = vmatprep.subr.mxu0 0.0
    %329 = vmatpush1.msra.mxu0 0.0
    %330 = vmatprep.subr.mxu0 0.0
    %331 = vmatpush1.msra.mxu0 0.0
    %332 = vmatprep.subr.mxu0 0.0
    %333 = vmatpush1.msra.mxu0 0.0
    %334 = vmatprep.subr.mxu0 0.0
    %335 = vmatpush1.msra.mxu0 0.0
    %336 = vmatprep.subr.mxu0 0.0
    %337 = vmatpush1.msra.mxu0 0.0
    %338 = vmatprep.subr.mxu0 0.0
    %339 = vmatpush1.msra.mxu0 0.0
    %340 = vmatprep.subr.mxu0 0.0
    %341 = vmatpush1.msra.mxu0 0.0
    %342 = vmatprep.subr.mxu0 0.0
    %343 = vmatpush1.msra.mxu0 0.0
    %344 = vmatprep.subr.mxu0 0.0
    %345 = vmatpush1.msra.mxu0 0.0
    %346 = vmatprep.subr.mxu0 0.0
    %347 = vmatpush1.msra.mxu0 %v22
    %348 = vmatprep.subr.mxu0 0.0
    %349 = vmatpush1.msra.mxu0 %v21
    %350 = vmatprep.subr.mxu0 0.0
    %351 = vmatpush1.msra.mxu0 %v20
    %352 = vmatprep.subr.mxu0 0.0
    %353 = vmatpush1.msra.mxu0 %v19
    %354 = vmatprep.subr.mxu0 0.0
    %355 = vmatpush2.msra.mxu0 0.0
    %356 = vmatprep.subr.mxu0 0.0
    %357 = vmatpush2.msra.mxu0 0.0
    %358 = vmatprep.subr.mxu0 0.0
    %359 = vmatpush2.msra.mxu0 0.0
    %360 = vmatprep.subr.mxu0 0.0
    %361 = vmatpush2.msra.mxu0 0.0
    %362 = vmatprep.subr.mxu0 0.0
    %363 = vmatpush2.msra.mxu0 0.0
    %364 = vmatprep.subr.mxu0 0.0
    %365 = vmatpush2.msra.mxu0 0.0
    %366 = vmatprep.subr.mxu0 0.0
    %367 = vmatpush2.msra.mxu0 0.0
    %368 = vmatprep.subr.mxu0 0.0
    %369 = vmatpush2.msra.mxu0 0.0
    %370 = vmatprep.subr.mxu0 0.0
    %371 = vmatpush2.msra.mxu0 0.0
    %372 = vmatprep.subr.mxu0 0.0
    %373 = vmatpush2.msra.mxu0 0.0
    %374 = vmatprep.subr.mxu0 0.0
    %375 = vmatpush2.msra.mxu0 0.0
    %376 = vmatprep.subr.mxu0 0.0
    %377 = vmatpush2.msra.mxu0 0.0
    %378 = vmatprep.subr.mxu0 0.0
    %379 = vmatpush2.msra.mxu0 0.0
    %380 = vmatprep.subr.mxu0 0.0
    %381 = vmatpush2.msra.mxu0 0.0
    %382 = vmatprep.subr.mxu0 0.0
    %383 = vmatpush2.msra.mxu0 0.0
    %384 = vmatprep.subr.mxu0 0.0
    %385 = vmatpush2.msra.mxu0 0.0
    %386 = vmatprep.mubr.f32.mxu0 0.0
    %387 = vmatmul.mubr.f32.gmra.mxu0 %v320
    %v388 = vpop.f32.mrf.mxu0
    %v389 = vadd.f32 0.0, %v388
    %v390 = vpop.f32.mrf.mxu0
    %391 = vdwg.mxu0
    %v393 = vrot.slane %v389, 6
    %v395 = vadd.f32 %v100, %v393
    %v396 = vmul.f32 %v395, %v108
    %v397 = vtanh.pop %v396
    %v398 = vmul.f32 %v108, %v397
    %v399 = vadd.f32 %v398, %v109
    %v401 = vrot.slane %v304, 7
    %v403 = vmul.f32 %v399, %v401
    %405 = vrot.lane.b32.xlu0 %v399, 64
    %v406 = vpop.permute.xlu0 %405
    %v408 = vmul.f32 %v399, %v406
    %410 = vrot.lane.b32.xlu0 %v408, 32
    %v411 = vpop.permute.xlu0 %410
    %v413 = vadd.f32 %v403, %v411
    %v414 = vtanh.pop %v413
    %416 = vrot.lane.b32.xlu0 %v414, 64
    %v417 = vpop.permute.xlu0 %416
    %v419 = vmul.f32 %v399, %v417
    %421 = vrot.lane.b32.xlu0 %v419, 32
    %v422 = vpop.permute.xlu0 %421
    %vm424 = vcmask 256002
    %425 = vst.msk [vmem:[#allocation2] sm:$0x4] %vm424, %v422
    %v426 = vrot.slane %v419, 2
    %427 = vrot.lane.b32.xlu0 %v426, 32
    %v428 = vpop.permute.xlu0 %427
    %v429 = vsel %vm29, %v428, 0
    %431 = vmatprep.subr.mxu0 0.0
    %432 = vmatpush1.msra.mxu0 0.0
    %433 = vmatprep.subr.mxu0 0.0
    %434 = vmatpush1.msra.mxu0 0.0
    %435 = vmatprep.subr.mxu0 0.0
    %436 = vmatpush1.msra.mxu0 0.0
    %437 = vmatprep.subr.mxu0 0.0
    %438 = vmatpush1.msra.mxu0 0.0
    %439 = vmatprep.subr.mxu0 0.0
    %440 = vmatpush1.msra.mxu0 0.0
    %441 = vmatprep.subr.mxu0 0.0
    %442 = vmatpush1.msra.mxu0 0.0
    %443 = vmatprep.subr.mxu0 0.0
    %444 = vmatpush1.msra.mxu0 0.0
    %445 = vmatprep.subr.mxu0 0.0
    %446 = vmatpush1.msra.mxu0 0.0
    %447 = vmatprep.subr.mxu0 0.0
    %448 = vmatpush1.msra.mxu0 0.0
    %449 = vmatprep.subr.mxu0 0.0
    %450 = vmatpush1.msra.mxu0 0.0
    %451 = vmatprep.subr.mxu0 0.0
    %452 = vmatpush1.msra.mxu0 0.0
    %453 = vmatprep.subr.mxu0 0.0
    %454 = vmatpush1.msra.mxu0 0.0
    %455 = vmatprep.subr.mxu0 0.0
    %456 = vmatpush1.msra.mxu0 %v22
    %457 = vmatprep.subr.mxu0 0.0
    %458 = vmatpush1.msra.mxu0 %v21
    %459 = vmatprep.subr.mxu0 0.0
    %460 = vmatpush1.msra.mxu0 %v20
    %461 = vmatprep.subr.mxu0 0.0
    %462 = vmatpush1.msra.mxu0 %v19
    %463 = vmatprep.subr.mxu0 0.0
    %464 = vmatpush2.msra.mxu0 0.0
    %465 = vmatprep.subr.mxu0 0.0
    %466 = vmatpush2.msra.mxu0 0.0
    %467 = vmatprep.subr.mxu0 0.0
    %468 = vmatpush2.msra.mxu0 0.0
    %469 = vmatprep.subr.mxu0 0.0
    %470 = vmatpush2.msra.mxu0 0.0
    %471 = vmatprep.subr.mxu0 0.0
    %472 = vmatpush2.msra.mxu0 0.0
    %473 = vmatprep.subr.mxu0 0.0
    %474 = vmatpush2.msra.mxu0 0.0
    %475 = vmatprep.subr.mxu0 0.0
    %476 = vmatpush2.msra.mxu0 0.0
    %477 = vmatprep.subr.mxu0 0.0
    %478 = vmatpush2.msra.mxu0 0.0
    %479 = vmatprep.subr.mxu0 0.0
    %480 = vmatpush2.msra.mxu0 0.0
    %481 = vmatprep.subr.mxu0 0.0
    %482 = vmatpush2.msra.mxu0 0.0
    %483 = vmatprep.subr.mxu0 0.0
    %484 = vmatpush2.msra.mxu0 0.0
    %485 = vmatprep.subr.mxu0 0.0
    %486 = vmatpush2.msra.mxu0 0.0
    %487 = vmatprep.subr.mxu0 0.0
    %488 = vmatpush2.msra.mxu0 0.0
    %489 = vmatprep.subr.mxu0 0.0
    %490 = vmatpush2.msra.mxu0 0.0
    %491 = vmatprep.subr.mxu0 0.0
    %492 = vmatpush2.msra.mxu0 0.0
    %493 = vmatprep.subr.mxu0 0.0
    %494 = vmatpush2.msra.mxu0 0.0
    %495 = vmatprep.mubr.f32.mxu0 0.0
    %496 = vmatmul.mubr.f32.gmra.mxu0 %v429
    %v497 = vpop.f32.mrf.mxu0
    %v498 = vadd.f32 0.0, %v497
    %v499 = vpop.f32.mrf.mxu0
    %500 = vdwg.mxu0
    %v502 = vrot.slane %v498, 5
    %v504 = vadd.f32 %v100, %v502
    %v505 = vmul.f32 %v504, %v108
    %v506 = vtanh.pop %v505
    %v507 = vmul.f32 %v108, %v506
    %v508 = vadd.f32 %v507, %v109
    %v510 = vrot.slane %v413, 7
    %v512 = vmul.f32 %v508, %v510
    %514 = vrot.lane.b32.xlu0 %v508, 64
    %v515 = vpop.permute.xlu0 %514
    %v517 = vmul.f32 %v508, %v515
    %519 = vrot.lane.b32.xlu0 %v517, 32
    %v520 = vpop.permute.xlu0 %519
    %v522 = vadd.f32 %v512, %v520
    %v523 = vtanh.pop %v522
    %525 = vrot.lane.b32.xlu0 %v523, 64
    %v526 = vpop.permute.xlu0 %525
    %v528 = vmul.f32 %v508, %v526
    %530 = vrot.lane.b32.xlu0 %v528, 32
    %v531 = vpop.permute.xlu0 %530
    %vm533 = vcmask 257027
    %534 = vst.msk [vmem:[#allocation2] sm:$0x8] %vm533, %v531
    %v535 = vrot.slane %v528, 3
    %536 = vrot.lane.b32.xlu0 %v535, 32
    %v537 = vpop.permute.xlu0 %536
    %v538 = vsel %vm29, %v537, 0
    %540 = vmatprep.subr.mxu0 0.0
    %541 = vmatpush1.msra.mxu0 0.0
    %542 = vmatprep.subr.mxu0 0.0
    %543 = vmatpush1.msra.mxu0 0.0
    %544 = vmatprep.subr.mxu0 0.0
    %545 = vmatpush1.msra.mxu0 0.0
    %546 = vmatprep.subr.mxu0 0.0
    %547 = vmatpush1.msra.mxu0 0.0
    %548 = vmatprep.subr.mxu0 0.0
    %549 = vmatpush1.msra.mxu0 0.0
    %550 = vmatprep.subr.mxu0 0.0
    %551 = vmatpush1.msra.mxu0 0.0
    %552 = vmatprep.subr.mxu0 0.0
    %553 = vmatpush1.msra.mxu0 0.0
    %554 = vmatprep.subr.mxu0 0.0
    %555 = vmatpush1.msra.mxu0 0.0
    %556 = vmatprep.subr.mxu0 0.0
    %557 = vmatpush1.msra.mxu0 0.0
    %558 = vmatprep.subr.mxu0 0.0
    %559 = vmatpush1.msra.mxu0 0.0
    %560 = vmatprep.subr.mxu0 0.0
    %561 = vmatpush1.msra.mxu0 0.0
    %562 = vmatprep.subr.mxu0 0.0
    %563 = vmatpush1.msra.mxu0 0.0
    %564 = vmatprep.subr.mxu0 0.0
    %565 = vmatpush1.msra.mxu0 %v22
    %566 = vmatprep.subr.mxu0 0.0
    %567 = vmatpush1.msra.mxu0 %v21
    %568 = vmatprep.subr.mxu0 0.0
    %569 = vmatpush1.msra.mxu0 %v20
    %570 = vmatprep.subr.mxu0 0.0
    %571 = vmatpush1.msra.mxu0 %v19
    %572 = vmatprep.subr.mxu0 0.0
    %573 = vmatpush2.msra.mxu0 0.0
    %574 = vmatprep.subr.mxu0 0.0
    %575 = vmatpush2.msra.mxu0 0.0
    %576 = vmatprep.subr.mxu0 0.0
    %577 = vmatpush2.msra.mxu0 0.0
    %578 = vmatprep.subr.mxu0 0.0
    %579 = vmatpush2.msra.mxu0 0.0
    %580 = vmatprep.subr.mxu0 0.0
    %581 = vmatpush2.msra.mxu0 0.0
    %582 = vmatprep.subr.mxu0 0.0
    %583 = vmatpush2.msra.mxu0 0.0
    %584 = vmatprep.subr.mxu0 0.0
    %585 = vmatpush2.msra.mxu0 0.0
    %586 = vmatprep.subr.mxu0 0.0
    %587 = vmatpush2.msra.mxu0 0.0
    %588 = vmatprep.subr.mxu0 0.0
    %589 = vmatpush2.msra.mxu0 0.0
    %590 = vmatprep.subr.mxu0 0.0
    %591 = vmatpush2.msra.mxu0 0.0
    %592 = vmatprep.subr.mxu0 0.0
    %593 = vmatpush2.msra.mxu0 0.0
    %594 = vmatprep.subr.mxu0 0.0
    %595 = vmatpush2.msra.mxu0 0.0
    %596 = vmatprep.subr.mxu0 0.0
    %597 = vmatpush2.msra.mxu0 0.0
    %598 = vmatprep.subr.mxu0 0.0
    %599 = vmatpush2.msra.mxu0 0.0
    %600 = vmatprep.subr.mxu0 0.0
    %601 = vmatpush2.msra.mxu0 0.0
    %602 = vmatprep.subr.mxu0 0.0
    %603 = vmatpush2.msra.mxu0 0.0
    %604 = vmatprep.mubr.f32.mxu0 0.0
    %605 = vmatmul.mubr.f32.gmra.mxu0 %v538
    %v606 = vpop.f32.mrf.mxu0
    %v607 = vadd.f32 0.0, %v606
    %v608 = vpop.f32.mrf.mxu0
    %609 = vdwg.mxu0
    %v611 = vrot.slane %v607, 4
    %v613 = vadd.f32 %v100, %v611
    %v614 = vmul.f32 %v613, %v108
    %v615 = vtanh.pop %v614
    %v616 = vmul.f32 %v108, %v615
    %v617 = vadd.f32 %v616, %v109
    %v619 = vrot.slane %v522, 7
    %v621 = vmul.f32 %v617, %v619
    %623 = vrot.lane.b32.xlu0 %v617, 64
    %v624 = vpop.permute.xlu0 %623
    %v626 = vmul.f32 %v617, %v624
    %628 = vrot.lane.b32.xlu0 %v626, 32
    %v629 = vpop.permute.xlu0 %628
    %v631 = vadd.f32 %v621, %v629
    %v632 = vtanh.pop %v631
    %634 = vrot.lane.b32.xlu0 %v632, 64
    %v635 = vpop.permute.xlu0 %634
    %v637 = vmul.f32 %v617, %v635
    %639 = vrot.lane.b32.xlu0 %v637, 32
    %v640 = vpop.permute.xlu0 %639
    %vm642 = vcmask 258052
    %643 = vst.msk [vmem:[#allocation2] sm:$0x10] %vm642, %v640
    %v644 = vrot.slane %v637, 4
    %645 = vrot.lane.b32.xlu0 %v644, 32
    %v646 = vpop.permute.xlu0 %645
    %v647 = vsel %vm29, %v646, 0
    %649 = vmatprep.subr.mxu0 0.0
    %650 = vmatpush1.msra.mxu0 0.0
    %651 = vmatprep.subr.mxu0 0.0
    %652 = vmatpush1.msra.mxu0 0.0
    %653 = vmatprep.subr.mxu0 0.0
    %654 = vmatpush1.msra.mxu0 0.0
    %655 = vmatprep.subr.mxu0 0.0
    %656 = vmatpush1.msra.mxu0 0.0
    %657 = vmatprep.subr.mxu0 0.0
    %658 = vmatpush1.msra.mxu0 0.0
    %659 = vmatprep.subr.mxu0 0.0
    %660 = vmatpush1.msra.mxu0 0.0
    %661 = vmatprep.subr.mxu0 0.0
    %662 = vmatpush1.msra.mxu0 0.0
    %663 = vmatprep.subr.mxu0 0.0
    %664 = vmatpush1.msra.mxu0 0.0
    %665 = vmatprep.subr.mxu0 0.0
    %666 = vmatpush1.msra.mxu0 0.0
    %667 = vmatprep.subr.mxu0 0.0
    %668 = vmatpush1.msra.mxu0 0.0
    %669 = vmatprep.subr.mxu0 0.0
    %670 = vmatpush1.msra.mxu0 0.0
    %671 = vmatprep.subr.mxu0 0.0
    %672 = vmatpush1.msra.mxu0 0.0
    %673 = vmatprep.subr.mxu0 0.0
    %674 = vmatpush1.msra.mxu0 %v22
    %675 = vmatprep.subr.mxu0 0.0
    %676 = vmatpush1.msra.mxu0 %v21
    %677 = vmatprep.subr.mxu0 0.0
    %678 = vmatpush1.msra.mxu0 %v20
    %679 = vmatprep.subr.mxu0 0.0
    %680 = vmatpush1.msra.mxu0 %v19
    %681 = vmatprep.subr.mxu0 0.0
    %682 = vmatpush2.msra.mxu0 0.0
    %683 = vmatprep.subr.mxu0 0.0
    %684 = vmatpush2.msra.mxu0 0.0
    %685 = vmatprep.subr.mxu0 0.0
    %686 = vmatpush2.msra.mxu0 0.0
    %687 = vmatprep.subr.mxu0 0.0
    %688 = vmatpush2.msra.mxu0 0.0
    %689 = vmatprep.subr.mxu0 0.0
    %690 = vmatpush2.msra.mxu0 0.0
    %691 = vmatprep.subr.mxu0 0.0
    %692 = vmatpush2.msra.mxu0 0.0
    %693 = vmatprep.subr.mxu0 0.0
    %694 = vmatpush2.msra.mxu0 0.0
    %695 = vmatprep.subr.mxu0 0.0
    %696 = vmatpush2.msra.mxu0 0.0
    %697 = vmatprep.subr.mxu0 0.0
    %698 = vmatpush2.msra.mxu0 0.0
    %699 = vmatprep.subr.mxu0 0.0
    %700 = vmatpush2.msra.mxu0 0.0
    %701 = vmatprep.subr.mxu0 0.0
    %702 = vmatpush2.msra.mxu0 0.0
    %703 = vmatprep.subr.mxu0 0.0
    %704 = vmatpush2.msra.mxu0 0.0
    %705 = vmatprep.subr.mxu0 0.0
    %706 = vmatpush2.msra.mxu0 0.0
    %707 = vmatprep.subr.mxu0 0.0
    %708 = vmatpush2.msra.mxu0 0.0
    %709 = vmatprep.subr.mxu0 0.0
    %710 = vmatpush2.msra.mxu0 0.0
    %711 = vmatprep.subr.mxu0 0.0
    %712 = vmatpush2.msra.mxu0 0.0
    %713 = vmatprep.mubr.f32.mxu0 0.0
    %714 = vmatmul.mubr.f32.gmra.mxu0 %v647
    %v715 = vpop.f32.mrf.mxu0
    %v716 = vadd.f32 0.0, %v715
    %v717 = vpop.f32.mrf.mxu0
    %718 = vdwg.mxu0
    %v720 = vrot.slane %v716, 3
    %v722 = vadd.f32 %v100, %v720
    %v723 = vmul.f32 %v722, %v108
    %v724 = vtanh.pop %v723
    %v725 = vmul.f32 %v108, %v724
    %v726 = vadd.f32 %v725, %v109
    %v728 = vrot.slane %v631, 7
    %v730 = vmul.f32 %v726, %v728
    %732 = vrot.lane.b32.xlu0 %v726, 64
    %v733 = vpop.permute.xlu0 %732
    %v735 = vmul.f32 %v726, %v733
    %737 = vrot.lane.b32.xlu0 %v735, 32
    %v738 = vpop.permute.xlu0 %737
    %v740 = vadd.f32 %v730, %v738
    %v741 = vtanh.pop %v740
    %743 = vrot.lane.b32.xlu0 %v741, 64
    %v744 = vpop.permute.xlu0 %743
    %v746 = vmul.f32 %v726, %v744
    %748 = vrot.lane.b32.xlu0 %v746, 32
    %v749 = vpop.permute.xlu0 %748
    %vm751 = vcmask 259077
    %752 = vst.msk [vmem:[#allocation2] sm:$0x20] %vm751, %v749
    %v753 = vrot.slane %v746, 5
    %754 = vrot.lane.b32.xlu0 %v753, 32
    %v755 = vpop.permute.xlu0 %754
    %v756 = vsel %vm29, %v755, 0
    %758 = vmatprep.subr.mxu0 0.0
    %759 = vmatpush1.msra.mxu0 0.0
    %760 = vmatprep.subr.mxu0 0.0
    %761 = vmatpush1.msra.mxu0 0.0
    %762 = vmatprep.subr.mxu0 0.0
    %763 = vmatpush1.msra.mxu0 0.0
    %764 = vmatprep.subr.mxu0 0.0
    %765 = vmatpush1.msra.mxu0 0.0
    %766 = vmatprep.subr.mxu0 0.0
    %767 = vmatpush1.msra.mxu0 0.0
    %768 = vmatprep.subr.mxu0 0.0
    %769 = vmatpush1.msra.mxu0 0.0
    %770 = vmatprep.subr.mxu0 0.0
    %771 = vmatpush1.msra.mxu0 0.0
    %772 = vmatprep.subr.mxu0 0.0
    %773 = vmatpush1.msra.mxu0 0.0
    %774 = vmatprep.subr.mxu0 0.0
    %775 = vmatpush1.msra.mxu0 0.0
    %776 = vmatprep.subr.mxu0 0.0
    %777 = vmatpush1.msra.mxu0 0.0
    %778 = vmatprep.subr.mxu0 0.0
    %779 = vmatpush1.msra.mxu0 0.0
    %780 = vmatprep.subr.mxu0 0.0
    %781 = vmatpush1.msra.mxu0 0.0
    %782 = vmatprep.subr.mxu0 0.0
    %783 = vmatpush1.msra.mxu0 %v22
    %784 = vmatprep.subr.mxu0 0.0
    %785 = vmatpush1.msra.mxu0 %v21
    %786 = vmatprep.subr.mxu0 0.0
    %787 = vmatpush1.msra.mxu0 %v20
    %788 = vmatprep.subr.mxu0 0.0
    %789 = vmatpush1.msra.mxu0 %v19
    %790 = vmatprep.subr.mxu0 0.0
    %791 = vmatpush2.msra.mxu0 0.0
    %792 = vmatprep.subr.mxu0 0.0
    %793 = vmatpush2.msra.mxu0 0.0
    %794 = vmatprep.subr.mxu0 0.0
    %795 = vmatpush2.msra.mxu0 0.0
    %796 = vmatprep.subr.mxu0 0.0
    %797 = vmatpush2.msra.mxu0 0.0
    %798 = vmatprep.subr.mxu0 0.0
    %799 = vmatpush2.msra.mxu0 0.0
    %800 = vmatprep.subr.mxu0 0.0
    %801 = vmatpush2.msra.mxu0 0.0
    %802 = vmatprep.subr.mxu0 0.0
    %803 = vmatpush2.msra.mxu0 0.0
    %804 = vmatprep.subr.mxu0 0.0
    %805 = vmatpush2.msra.mxu0 0.0
    %806 = vmatprep.subr.mxu0 0.0
    %807 = vmatpush2.msra.mxu0 0.0
    %808 = vmatprep.subr.mxu0 0.0
    %809 = vmatpush2.msra.mxu0 0.0
    %810 = vmatprep.subr.mxu0 0.0
    %811 = vmatpush2.msra.mxu0 0.0
    %812 = vmatprep.subr.mxu0 0.0
    %813 = vmatpush2.msra.mxu0 0.0
    %814 = vmatprep.subr.mxu0 0.0
    %815 = vmatpush2.msra.mxu0 0.0
    %816 = vmatprep.subr.mxu0 0.0
    %817 = vmatpush2.msra.mxu0 0.0
    %818 = vmatprep.subr.mxu0 0.0
    %819 = vmatpush2.msra.mxu0 0.0
    %820 = vmatprep.subr.mxu0 0.0
    %821 = vmatpush2.msra.mxu0 0.0
    %822 = vmatprep.mubr.f32.mxu0 0.0
    %823 = vmatmul.mubr.f32.gmra.mxu0 %v756
    %v824 = vpop.f32.mrf.mxu0
    %v825 = vadd.f32 0.0, %v824
    %v826 = vpop.f32.mrf.mxu0
    %827 = vdwg.mxu0
    %v829 = vrot.slane %v825, 2
    %v831 = vadd.f32 %v100, %v829
    %v832 = vmul.f32 %v831, %v108
    %v833 = vtanh.pop %v832
    %v834 = vmul.f32 %v108, %v833
    %v835 = vadd.f32 %v834, %v109
    %v837 = vrot.slane %v740, 7
    %v839 = vmul.f32 %v835, %v837
    %841 = vrot.lane.b32.xlu0 %v835, 64
    %v842 = vpop.permute.xlu0 %841
    %v844 = vmul.f32 %v835, %v842
    %846 = vrot.lane.b32.xlu0 %v844, 32
    %v847 = vpop.permute.xlu0 %846
    %v849 = vadd.f32 %v839, %v847
    %v850 = vtanh.pop %v849
    %852 = vrot.lane.b32.xlu0 %v850, 64
    %v853 = vpop.permute.xlu0 %852
    %v855 = vmul.f32 %v835, %v853
    %857 = vrot.lane.b32.xlu0 %v855, 32
    %v858 = vpop.permute.xlu0 %857
    %vm860 = vcmask 260102
    %861 = vst.msk [vmem:[#allocation2] sm:$0x40] %vm860, %v858
    %v862 = vrot.slane %v855, 6
    %863 = vrot.lane.b32.xlu0 %v862, 32
    %v864 = vpop.permute.xlu0 %863
    %v865 = vsel %vm29, %v864, 0
    %867 = vmatprep.subr.mxu0 0.0
    %868 = vmatpush1.msra.mxu0 0.0
    %869 = vmatprep.subr.mxu0 0.0
    %870 = vmatpush1.msra.mxu0 0.0
    %871 = vmatprep.subr.mxu0 0.0
    %872 = vmatpush1.msra.mxu0 0.0
    %873 = vmatprep.subr.mxu0 0.0
    %874 = vmatpush1.msra.mxu0 0.0
    %875 = vmatprep.subr.mxu0 0.0
    %876 = vmatpush1.msra.mxu0 0.0
    %877 = vmatprep.subr.mxu0 0.0
    %878 = vmatpush1.msra.mxu0 0.0
    %879 = vmatprep.subr.mxu0 0.0
    %880 = vmatpush1.msra.mxu0 0.0
    %881 = vmatprep.subr.mxu0 0.0
    %882 = vmatpush1.msra.mxu0 0.0
    %883 = vmatprep.subr.mxu0 0.0
    %884 = vmatpush1.msra.mxu0 0.0
    %885 = vmatprep.subr.mxu0 0.0
    %886 = vmatpush1.msra.mxu0 0.0
    %887 = vmatprep.subr.mxu0 0.0
    %888 = vmatpush1.msra.mxu0 0.0
    %889 = vmatprep.subr.mxu0 0.0
    %890 = vmatpush1.msra.mxu0 0.0
    %891 = vmatprep.subr.mxu0 0.0
    %892 = vmatpush1.msra.mxu0 %v22
    %893 = vmatprep.subr.mxu0 0.0
    %894 = vmatpush1.msra.mxu0 %v21
    %895 = vmatprep.subr.mxu0 0.0
    %896 = vmatpush1.msra.mxu0 %v20
    %897 = vmatprep.subr.mxu0 0.0
    %898 = vmatpush1.msra.mxu0 %v19
    %899 = vmatprep.subr.mxu0 0.0
    %900 = vmatpush2.msra.mxu0 0.0
    %901 = vmatprep.subr.mxu0 0.0
    %902 = vmatpush2.msra.mxu0 0.0
    %903 = vmatprep.subr.mxu0 0.0
    %904 = vmatpush2.msra.mxu0 0.0
    %905 = vmatprep.subr.mxu0 0.0
    %906 = vmatpush2.msra.mxu0 0.0
    %907 = vmatprep.subr.mxu0 0.0
    %908 = vmatpush2.msra.mxu0 0.0
    %909 = vmatprep.subr.mxu0 0.0
    %910 = vmatpush2.msra.mxu0 0.0
    %911 = vmatprep.subr.mxu0 0.0
    %912 = vmatpush2.msra.mxu0 0.0
    %913 = vmatprep.subr.mxu0 0.0
    %914 = vmatpush2.msra.mxu0 0.0
    %915 = vmatprep.subr.mxu0 0.0
    %916 = vmatpush2.msra.mxu0 0.0
    %917 = vmatprep.subr.mxu0 0.0
    %918 = vmatpush2.msra.mxu0 0.0
    %919 = vmatprep.subr.mxu0 0.0
    %920 = vmatpush2.msra.mxu0 0.0
    %921 = vmatprep.subr.mxu0 0.0
    %922 = vmatpush2.msra.mxu0 0.0
    %923 = vmatprep.subr.mxu0 0.0
    %924 = vmatpush2.msra.mxu0 0.0
    %925 = vmatprep.subr.mxu0 0.0
    %926 = vmatpush2.msra.mxu0 0.0
    %927 = vmatprep.subr.mxu0 0.0
    %928 = vmatpush2.msra.mxu0 0.0
    %929 = vmatprep.subr.mxu0 0.0
    %930 = vmatpush2.msra.mxu0 0.0
    %931 = vmatprep.mubr.f32.mxu0 0.0
    %932 = vmatmul.mubr.f32.gmra.mxu0 %v865
    %v933 = vpop.f32.mrf.mxu0
    %v934 = vadd.f32 0.0, %v933
    %v935 = vpop.f32.mrf.mxu0
    %936 = vdwg.mxu0
    %v938 = vrot.slane %v934, 1
    %v940 = vadd.f32 %v100, %v938
    %v941 = vmul.f32 %v940, %v108
    %v942 = vtanh.pop %v941
    %v943 = vmul.f32 %v108, %v942
    %v944 = vadd.f32 %v943, %v109
    %v946 = vrot.slane %v849, 7
    %v948 = vmul.f32 %v944, %v946
    %950 = vrot.lane.b32.xlu0 %v944, 64
    %v951 = vpop.permute.xlu0 %950
    %v953 = vmul.f32 %v944, %v951
    %955 = vrot.lane.b32.xlu0 %v953, 32
    %v956 = vpop.permute.xlu0 %955
    %v958 = vadd.f32 %v948, %v956
    %v959 = vtanh.pop %v958
    %961 = vrot.lane.b32.xlu0 %v959, 64
    %v962 = vpop.permute.xlu0 %961
    %v964 = vmul.f32 %v944, %v962
    %966 = vrot.lane.b32.xlu0 %v964, 32
    %v967 = vpop.permute.xlu0 %966
    %vm969 = vcmask 261127
    %970 = vst.msk [vmem:[#allocation2] sm:$0x80] %vm969, %v967
    %v971 = vld [vmem:[%s2] sm:$0xff]
    %v972 = vld [vmem:[%s2 + $0x8] sm:$0xff]
    %v973 = vld [vmem:[%s2 + $0x10] sm:$0xff]
    %v974 = vld [vmem:[%s2 + $0x18] sm:$0xff]
    %v975 = vld [vmem:[%s2 + $0x20] sm:$0x1]
    %v976 = vld [vmem:[#allocation2] sm:$0xff]
    %v977 = vlaneseq
    %v978 = vshrl.u32 %v977, 7
    %v979 = vsub.s32 0, %v978
    %v980 = vrot.slane %v975, %v979
    %v982 = vsel %vm29, %v976, 0
    %984 = vmatprep.subr.mxu0 0.0
    %985 = vmatpush1.msra.mxu0 0.0
    %986 = vmatprep.subr.mxu0 0.0
    %987 = vmatpush1.msra.mxu0 0.0
    %988 = vmatprep.subr.mxu0 0.0
    %989 = vmatpush1.msra.mxu0 0.0
    %990 = vmatprep.subr.mxu0 0.0
    %991 = vmatpush1.msra.mxu0 0.0
    %992 = vmatprep.subr.mxu0 0.0
    %993 = vmatpush1.msra.mxu0 0.0
    %994 = vmatprep.subr.mxu0 0.0
    %995 = vmatpush1.msra.mxu0 0.0
    %996 = vmatprep.subr.mxu0 0.0
    %997 = vmatpush1.msra.mxu0 0.0
    %998 = vmatprep.subr.mxu0 0.0
    %999 = vmatpush1.msra.mxu0 0.0
    %1000 = vmatprep.subr.mxu0 0.0
    %1001 = vmatpush1.msra.mxu0 0.0
    %1002 = vmatprep.subr.mxu0 0.0
    %1003 = vmatpush1.msra.mxu0 0.0
    %1004 = vmatprep.subr.mxu0 0.0
    %1005 = vmatpush1.msra.mxu0 0.0
    %1006 = vmatprep.subr.mxu0 0.0
    %1007 = vmatpush1.msra.mxu0 0.0
    %1008 = vmatprep.subr.mxu0 0.0
    %1009 = vmatpush1.msra.mxu0 %v974
    %1010 = vmatprep.subr.mxu0 0.0
    %1011 = vmatpush1.msra.mxu0 %v973
    %1012 = vmatprep.subr.mxu0 0.0
    %1013 = vmatpush1.msra.mxu0 %v972
    %1014 = vmatprep.subr.mxu0 0.0
    %1015 = vmatpush1.msra.mxu0 %v971
    %1016 = vmatprep.subr.mxu0 0.0
    %1017 = vmatpush2.msra.mxu0 0.0
    %1018 = vmatprep.subr.mxu0 0.0
    %1019 = vmatpush2.msra.mxu0 0.0
    %1020 = vmatprep.subr.mxu0 0.0
    %1021 = vmatpush2.msra.mxu0 0.0
    %1022 = vmatprep.subr.mxu0 0.0
    %1023 = vmatpush2.msra.mxu0 0.0
    %1024 = vmatprep.subr.mxu0 0.0
    %1025 = vmatpush2.msra.mxu0 0.0
    %1026 = vmatprep.subr.mxu0 0.0
    %1027 = vmatpush2.msra.mxu0 0.0
    %1028 = vmatprep.subr.mxu0 0.0
    %1029 = vmatpush2.msra.mxu0 0.0
    %1030 = vmatprep.subr.mxu0 0.0
    %1031 = vmatpush2.msra.mxu0 0.0
    %1032 = vmatprep.subr.mxu0 0.0
    %1033 = vmatpush2.msra.mxu0 0.0
    %1034 = vmatprep.subr.mxu0 0.0
    %1035 = vmatpush2.msra.mxu0 0.0
    %1036 = vmatprep.subr.mxu0 0.0
    %1037 = vmatpush2.msra.mxu0 0.0
    %1038 = vmatprep.subr.mxu0 0.0
    %1039 = vmatpush2.msra.mxu0 0.0
    %1040 = vmatprep.subr.mxu0 0.0
    %1041 = vmatpush2.msra.mxu0 0.0
    %1042 = vmatprep.subr.mxu0 0.0
    %1043 = vmatpush2.msra.mxu0 0.0
    %1044 = vmatprep.subr.mxu0 0.0
    %1045 = vmatpush2.msra.mxu0 0.0
    %1046 = vmatprep.subr.mxu0 0.0
    %1047 = vmatpush2.msra.mxu0 0.0
    %1048 = vmatprep.mubr.f32.mxu0 0.0
    %1049 = vmatmul.mubr.f32.gmra.mxu0 %v982
    %v1050 = vpop.f32.mrf.mxu0
    %v1051 = vadd.f32 %v980, %v1050
    %v1052 = vpop.f32.mrf.mxu0
    %1053 = vdwg.mxu0
    %vm1054 = vcmask 64512
    %v1055 = vsel %vm1054, %v1051, -inf
    %1056 = vmax.xlane.f32.xlu0 %v1055
    %v1057 = vpop.xlane.xlu0 %1056
    %v1058 = vsub.f32 %v1051, %v1057
    %v1059 = vmul.f32 %v1058, 1.442695
    %v1060 = vpow.pop %v1059
    %v1061 = vsel %vm1054, %v1060, 0.0
    %1062 = vadd.xlane.f32.xlu0 %v1061
    %v1063 = vpop.xlane.xlu0 %1062
    %v1064 = vlog2.pop %v1063
    %v1065 = vmul.f32 %v1064, 0.6931472
    %v1066 = vadd.f32 %v1057, %v1065
    %v1067 = vsub.f32 %v1051, %v1066
    %1068 = vst.msk [vmem:[#allocation3] sm:$0xff] %vm1054, %v1067
    // Predicated region
    $region14: #{lstm_tagger_forward.1} parent=1 // pred_check
      _
    $region15: #{lstm_tagger_forward.1} parent=1 // pred_check_branch
      %1070 = sbr.rel (0) target = $region17
    $region16: #{lstm_tagger_forward.1} parent=1 // pred_region
      %s1072 = ssub.s32 128, 128
      %1073 = vsyncadd [#allocation4], %s1072
      %s1075 = sshll.u32 [#allocation3], 4
      %s1076 = int_to_ptr.vmem [resolvable:$true] %s1075
      %1078 = dma.vmem_to_hbm [thread:$0]  %s1076, 128, %s3, [#allocation4]
    $region17: #{lstm_tagger_forward.1} parent=1 // pred_fallthru
      _
    // Predicated region
    $region18: #{lstm_tagger_forward.1} parent=1 // pred_check
      _
    $region19: #{lstm_tagger_forward.1} parent=1 // pred_check_branch
      %1080 = sbr.rel (0) target = $region21
    $region20: #{lstm_tagger_forward.1} parent=1 // pred_region
      %1081 = dma.done [#allocation4], 128
    $region21: #{lstm_tagger_forward.1} parent=1 // pred_fallthru
      _
    %1082 = vsyncpa [#allocation4], 1

</llo_original>
